<compile_context>
chip_gen: v6e
topology: v6e:2x2x1
jax: 0.10.0
libtpu: 0.0.40
codegen_flags: <defaults>
</compile_context>

<pallas_src>
import math

import jax
import jax.numpy as jnp
from jax.experimental import pallas as pl
from jax.experimental.pallas import tpu as pltpu

EPS = 1e-5
STYLE_DIM = 512


# ---------------------------------------------------------------------------
# VMEM budgeting (generation aware).
# ---------------------------------------------------------------------------
def _vmem_budget():
    """Returns (per-step resident VMEM budget, vmem_limit_bytes)."""
    tile_budget = 30 * 1024 * 1024      # conservative: v7x has 64 MiB VMEM per TC
    vmem_limit = 48 * 1024 * 1024
    try:
        cap = int(pltpu.get_tpu_info().vmem_capacity_bytes)
        if cap >= 128 * 1024 * 1024:    # v5e / v6e class parts
            tile_budget = 72 * 1024 * 1024
            vmem_limit = 100 * 1024 * 1024
    except Exception:
        pass
    return tile_budget, vmem_limit


def _aligned_divisor(total, max_tile, align):
    """Largest divisor of `total` that is a multiple of `align` and <= max_tile (or None)."""
    best = None
    d = align
    top = min(max_tile, total)
    while d <= top:
        if total % d == 0:
            best = d
        d += align
    return best


def _fast_path_plan(n, c, hw, itemsize, budget):
    """Channel tile for the fused single-pass kernel, or None if it cannot fit the budget."""
    # Per-channel-row cost: x + out blocks double-buffered at I/O dtype, ~3 full-size
    # f32 in-kernel temporaries, and gamma/beta (lane-padded to 128) double-buffered.
    per_ch = n * hw * itemsize * 4 + n * hw * 4 * 3 + 2 * 2 * n * 128 * 4
    max_tc = budget // per_ch
    if max_tc < 1:
        return None
    align = max(8, 32 // itemsize)      # sublane packing: 8 f32 / 16 bf16 / 32 int8
    if c <= max_tc:
        tc = c
    else:
        tc = _aligned_divisor(c, max_tc, align)
        if tc is None and align > 8:
            tc = _aligned_divisor(c, max_tc, 8)
        if tc is None:
            return None                 # no legal channel tile fits -> two-pass path
    # Megacore (v7x): make sure there are at least 2 channel tiles when C allows it.
    if pl.cdiv(c, tc) < 2:
        for a in (align, 8):
            if c // 2 >= a:
                half = _aligned_divisor(c, c // 2, a)
                if half is not None:
                    tc = half
                    break
    return tc


def _spatial_plan(n, c, hw, itemsize, budget):
    """(channel tile, HW tile) for the two-pass path. Always legal, budget is soft."""
    align = max(8, 32 // itemsize)
    if c < 8:
        tc = c                          # full-dim block is the only legal choice
    elif c < align:
        tc = 8
    else:
        tc = align
    # Per-HW-element cost of the heavier (apply) pass: x in + out double-buffered
    # at I/O dtype plus ~2 f32 temporaries.
    col_bytes = max(1, n * tc * (4 * itemsize + 2 * 4))
    max_thw = max(128, (budget // col_bytes) // 128 * 128)
    if hw <= max_thw:
        thw = hw
    else:
        thw = _aligned_divisor(hw, max_thw, 128) or max_thw   # ragged edge handled by mask
    return tc, thw


# ---------------------------------------------------------------------------
# Kernels.
# ---------------------------------------------------------------------------
def _cbn_fused_kernel(x_ref, gamma_ref, beta_ref, out_ref):
    # x_ref: (N, TC, HW) full batch and spatial extent, channel-tiled.
    x = x_ref[...].astype(jnp.float32)
    n, _, hw = x.shape
    cnt = jnp.float32(n * hw)

    s1 = jnp.sum(x, axis=(0, 2), keepdims=True)            # (1, TC, 1)
    s2 = jnp.sum(x * x, axis=(0, 2), keepdims=True)        # (1, TC, 1)
    mean = s1 / cnt
    var = jnp.maximum(s2 / cnt - mean * mean, 0.0)          # clamp: cancellation safety
    inv_std = jax.lax.rsqrt(var + EPS)

    gamma = gamma_ref[...].astype(jnp.float32)              # (N, TC, 1)
    beta = beta_ref[...].astype(jnp.float32)                # (N, TC, 1)

    scale = gamma * inv_std                                 # (N, TC, 1)
    shift = beta - scale * mean                             # (N, TC, 1)
    out_ref[...] = (scale * x + shift).astype(out_ref.dtype)


def _make_stats_kernel(hw_total, thw):
    """Two-pass path, pass 1: accumulate per-channel sum / sum-of-squares over the HW grid
    axis (last, 'arbitrary'); the (1, TC, 1) output blocks are resident accumulators."""
    ragged = (hw_total % thw) != 0

    def kernel(x_ref, s1_ref, s2_ref):
        j = pl.program_id(1)

        @pl.when(j == 0)
        def _():
            s1_ref[...] = jnp.zeros_like(s1_ref)
            s2_ref[...] = jnp.zeros_like(s2_ref)

        x = x_ref[...].astype(jnp.float32)                  # (N, TC, THW)
        if ragged:
            col = jax.lax.broadcasted_iota(jnp.int32, x.shape, 2)
            x = jnp.where(col + j * thw < hw_total, x, 0.0)
        s1_ref[...] += jnp.sum(x, axis=(0, 2), keepdims=True)
        s2_ref[...] += jnp.sum(x * x, axis=(0, 2), keepdims=True)

    return kernel


def _affine_kernel(x_ref, scale_ref, shift_ref, out_ref):
    """Two-pass path, pass 2: out = scale * x + shift (per sample, per channel)."""
    x = x_ref[...].astype(jnp.float32)
    out_ref[...] = (scale_ref[...] * x + shift_ref[...]).astype(out_ref.dtype)


# ---------------------------------------------------------------------------
# pallas_call wrappers.
# ---------------------------------------------------------------------------
def _fused_call(x_flat, gamma, beta, tc, vmem_limit):
    n, c, hw = x_flat.shape
    itemsize = x_flat.dtype.itemsize
    cost = pl.CostEstimate(
        flops=5 * n * c * hw,
        transcendentals=c,
        bytes_accessed=2 * n * c * hw * itemsize + 2 * n * c * 4,
    )
    return pl.pallas_call(
        _cbn_fused_kernel,
        grid=(pl.cdiv(c, tc),),
        out_shape=jax.ShapeDtypeStruct((n, c, hw), x_flat.dtype),
        in_specs=[
            pl.BlockSpec((n, tc, hw), lambda i: (0, i, 0)),
            pl.BlockSpec((n, tc, 1), lambda i: (0, i, 0)),
            pl.BlockSpec((n, tc, 1), lambda i: (0, i, 0)),
        ],
        out_specs=pl.BlockSpec((n, tc, hw), lambda i: (0, i, 0)),
        compiler_params=pltpu.CompilerParams(
            dimension_semantics=("parallel",),
            vmem_limit_bytes=vmem_limit,
        ),
        cost_estimate=cost,
    )(x_flat, gamma, beta)


def _two_pass_call(x_flat, gamma, beta, budget, vmem_limit):
    n, c, hw = x_flat.shape
    itemsize = x_flat.dtype.itemsize
    tc, thw = _spatial_plan(n, c, hw, itemsize, budget)
    cg, hg = pl.cdiv(c, tc), pl.cdiv(hw, thw)

    # Pass 1: per-channel statistics.
    s1, s2 = pl.pallas_call(
        _make_stats_kernel(hw, thw),
        grid=(cg, hg),
        out_shape=[jax.ShapeDtypeStruct((1, c, 1), jnp.float32)] * 2,
        in_specs=[pl.BlockSpec((n, tc, thw), lambda i, j: (0, i, j))],
        out_specs=[pl.BlockSpec((1, tc, 1), lambda i, j: (0, i, 0))] * 2,
        compiler_params=pltpu.CompilerParams(
            dimension_semantics=("parallel", "arbitrary"),
            vmem_limit_bytes=vmem_limit,
        ),
        cost_estimate=pl.CostEstimate(
            flops=3 * n * c * hw, transcendentals=0,
            bytes_accessed=n * c * hw * itemsize + 2 * c * 4),
    )(x_flat)

    # Fold stats + gamma/beta into per-(sample, channel) scale / shift (tiny, in JAX).
    cnt = jnp.float32(n * hw)
    mean = s1.reshape(c) / cnt
    var = jnp.maximum(s2.reshape(c) / cnt - mean * mean, 0.0)
    inv_std = jax.lax.rsqrt(var + EPS)
    scale = (gamma * inv_std[None, :]).astype(jnp.float32)
    shift = (beta - scale * mean[None, :]).astype(jnp.float32)

    # Pass 2: elementwise apply (lane-dense HW tiles).
    return pl.pallas_call(
        _affine_kernel,
        grid=(cg, hg),
        out_shape=jax.ShapeDtypeStruct((n, c, hw), x_flat.dtype),
        in_specs=[
            pl.BlockSpec((n, tc, thw), lambda i, j: (0, i, j)),
            pl.BlockSpec((n, tc, 1), lambda i, j: (0, i, 0)),
            pl.BlockSpec((n, tc, 1), lambda i, j: (0, i, 0)),
        ],
        out_specs=pl.BlockSpec((n, tc, thw), lambda i, j: (0, i, j)),
        compiler_params=pltpu.CompilerParams(
            dimension_semantics=("parallel", "parallel"),
            vmem_limit_bytes=vmem_limit,
        ),
        cost_estimate=pl.CostEstimate(
            flops=2 * n * c * hw, transcendentals=0,
            bytes_accessed=2 * n * c * hw * itemsize + 2 * n * c * 4),
    )(x_flat, scale.reshape(n, c, 1), shift.reshape(n, c, 1))


def conditional_batch_norm(x, style, weight_orig, bias, *, tile_budget_bytes=None,
                           vmem_limit_bytes=None):
    """x: (N, C, H, W); style: (N, 512);
    weight_orig: (2C, 512) EqualLinear weight before EqualLR scaling; bias: (2C,)."""
    n, c, h, w = x.shape
    hw = h * w
    x_flat = x.reshape(n, c, hw)
    itemsize = x_flat.dtype.itemsize

    # --- EqualLinear hoisted out of the kernel (negligible FLOPs, poor MXU fit). ---
    # EqualLR: weight = weight_orig * sqrt(2 / fan_in), fan_in = 512. Scale folded here.
    eq_scale = jnp.float32(math.sqrt(2.0 / STYLE_DIM))
    w_t = weight_orig.astype(jnp.float32).T * eq_scale               # (512, 2C)
    s = style.astype(jnp.float32) @ w_t + bias.astype(jnp.float32)   # (N, 2C)
    gamma = s[:, :c]
    beta = s[:, c:]

    budget, vmem_limit = _vmem_budget()
    if tile_budget_bytes is not None:
        budget = int(tile_budget_bytes)
    if vmem_limit_bytes is not None:
        vmem_limit = int(vmem_limit_bytes)

    tc = _fast_path_plan(n, c, hw, itemsize, budget)
    if tc is not None:
        out = _fused_call(x_flat, gamma.reshape(n, c, 1), beta.reshape(n, c, 1),
                          tc, vmem_limit)
    else:
        out = _two_pass_call(x_flat, gamma, beta, budget, vmem_limit)
    return out.reshape(n, c, h, w)


# ---------------------------------------------------------------------------
# Pure-JAX reference mirroring the PyTorch forward.
# ---------------------------------------------------------------------------
def _reference(x, style, weight_orig, bias):
    c = x.shape[1]
    scale = math.sqrt(2.0 / STYLE_DIM)
    s = style @ (weight_orig * scale).T + bias          # (N, 2C)
    gamma = s[:, :c][:, :, None, None]
    beta = s[:, c:][:, :, None, None]
    mean = jnp.mean(x, axis=(0, 2, 3), keepdims=True)
    var = jnp.mean((x - mean) ** 2, axis=(0, 2, 3), keepdims=True)
    norm = (x - mean) / jnp.sqrt(var + EPS)
    return gamma * norm + beta


if __name__ == "__main__":
    key = jax.random.PRNGKey(0)
    k_x, k_s, k_w, k_x2, k_s2, k_w2 = jax.random.split(key, 6)

    # --- Test 1: typical small layer -> fused single-pass kernel. ---
    N, C, H, W = 2, 4, 16, 16
    x = jax.random.normal(k_x, (N, C, H, W), dtype=jnp.float32)
    style = jax.random.normal(k_s, (N, STYLE_DIM), dtype=jnp.float32)
    # EqualLinear init: weight.data.normal_(), bias zero; then bias[:C]=1, bias[C:]=0.
    weight_orig = jax.random.normal(k_w, (2 * C, STYLE_DIM), dtype=jnp.float32)
    bias = jnp.concatenate([jnp.ones((C,), jnp.float32), jnp.zeros((C,), jnp.float32)])

    out = jax.block_until_ready(conditional_batch_norm(x, style, weight_orig, bias))
    ref = _reference(x, style, weight_orig, bias)
    assert out.shape == (N, C, H, W)
    assert jnp.allclose(out, ref, atol=1e-4, rtol=1e-4), "fused path mismatch vs reference"

    # --- Test 2: force the two-pass (stats + affine) path with a ragged HW edge. ---
    N2, C2, H2, W2 = 2, 8, 9, 15            # HW = 135 -> ragged 128-lane tiles
    x2 = jax.random.normal(k_x2, (N2, C2, H2, W2), dtype=jnp.float32) * 3.0 + 5.0
    style2 = jax.random.normal(k_s2, (N2, STYLE_DIM), dtype=jnp.float32)
    weight_orig2 = jax.random.normal(k_w2, (2 * C2, STYLE_DIM), dtype=jnp.float32)
    bias2 = jnp.concatenate([jnp.ones((C2,), jnp.float32), jnp.zeros((C2,), jnp.float32)])

    out2 = jax.block_until_ready(
        conditional_batch_norm(x2, style2, weight_orig2, bias2, tile_budget_bytes=4096))
    ref2 = _reference(x2, style2, weight_orig2, bias2)
    assert out2.shape == (N2, C2, H2, W2)
    assert jnp.allclose(out2, ref2, atol=1e-4, rtol=1e-4), "two-pass path mismatch vs reference"

    print("KERNEL_OK")
</pallas_src>

<mosaic_0001>
module attributes {stable_mosaic.version = 11 : i64} {
  func.func @_cbn_fused_kernel(%arg0: i32, %arg1: memref<2x4x256xf32, #tpu.memory_space<vmem>>, %arg2: memref<2x4x1xf32, #tpu.memory_space<vmem>>, %arg3: memref<2x4x1xf32, #tpu.memory_space<vmem>>, %arg4: memref<2x4x256xf32, #tpu.memory_space<vmem>>) attributes {dimension_semantics = [#tpu.dimension_semantics<parallel>], iteration_bounds = array<i64: 1>, scalar_prefetch = 0 : i64, scratch_operands = 0 : i64, tpu.core_type = #tpu.core_type<tc>, window_params = [{transform_indices = @transform_0, window_bounds = array<i64: 2, 4, 256>}, {transform_indices = @transform_1, window_bounds = array<i64: 2, 4, 1>}, {transform_indices = @transform_2, window_bounds = array<i64: 2, 4, 1>}, {transform_indices = @transform_3, window_bounds = array<i64: 2, 4, 256>}]} {
    %c0 = arith.constant 0 : index
    %c0_0 = arith.constant 0 : index
    %c0_1 = arith.constant 0 : index
    %0 = vector.load %arg1[%c0, %c0_0, %c0_1] : memref<2x4x256xf32, #tpu.memory_space<vmem>>, vector<2x4x256xf32>
    %cst = arith.constant dense<0.000000e+00> : vector<4xf32>
    %1 = vector.multi_reduction <add>, %0, %cst [0, 2] : vector<2x4x256xf32> to vector<4xf32>
    %2 = vector.shape_cast %1 : vector<4xf32> to vector<1x4x1xf32>
    %3 = arith.mulf %0, %0 : vector<2x4x256xf32>
    %cst_2 = arith.constant dense<0.000000e+00> : vector<4xf32>
    %4 = vector.multi_reduction <add>, %3, %cst_2 [0, 2] : vector<2x4x256xf32> to vector<4xf32>
    %5 = vector.shape_cast %4 : vector<4xf32> to vector<1x4x1xf32>
    %cst_3 = arith.constant 5.120000e+02 : f32
    %6 = vector.broadcast %cst_3 : f32 to vector<1x4x1xf32>
    %7 = arith.divf %2, %6 : vector<1x4x1xf32>
    %cst_4 = arith.constant 5.120000e+02 : f32
    %8 = vector.broadcast %cst_4 : f32 to vector<1x4x1xf32>
    %9 = arith.divf %5, %8 : vector<1x4x1xf32>
    %10 = arith.mulf %7, %7 : vector<1x4x1xf32>
    %11 = arith.subf %9, %10 : vector<1x4x1xf32>
    %cst_5 = arith.constant 0.000000e+00 : f32
    %12 = vector.broadcast %cst_5 : f32 to vector<1x4x1xf32>
    %13 = arith.maximumf %11, %12 : vector<1x4x1xf32>
    %cst_6 = arith.constant 9.99999974E-6 : f32
    %14 = vector.broadcast %cst_6 : f32 to vector<1x4x1xf32>
    %15 = arith.addf %13, %14 : vector<1x4x1xf32>
    %16 = math.rsqrt %15 : vector<1x4x1xf32>
    %c0_7 = arith.constant 0 : index
    %c0_8 = arith.constant 0 : index
    %c0_9 = arith.constant 0 : index
    %17 = vector.load %arg2[%c0_7, %c0_8, %c0_9] : memref<2x4x1xf32, #tpu.memory_space<vmem>>, vector<2x4x1xf32>
    %c0_10 = arith.constant 0 : index
    %c0_11 = arith.constant 0 : index
    %c0_12 = arith.constant 0 : index
    %18 = vector.load %arg3[%c0_10, %c0_11, %c0_12] : memref<2x4x1xf32, #tpu.memory_space<vmem>>, vector<2x4x1xf32>
    %19 = vector.broadcast %16 : vector<1x4x1xf32> to vector<2x4x1xf32>
    %20 = arith.mulf %17, %19 : vector<2x4x1xf32>
    %21 = vector.broadcast %7 : vector<1x4x1xf32> to vector<2x4x1xf32>
    %22 = arith.mulf %20, %21 : vector<2x4x1xf32>
    %23 = arith.subf %18, %22 : vector<2x4x1xf32>
    %24 = vector.broadcast %20 : vector<2x4x1xf32> to vector<2x4x256xf32>
    %25 = arith.mulf %24, %0 : vector<2x4x256xf32>
    %26 = vector.broadcast %23 : vector<2x4x1xf32> to vector<2x4x256xf32>
    %27 = arith.addf %25, %26 : vector<2x4x256xf32>
    %c0_13 = arith.constant 0 : index
    %c0_14 = arith.constant 0 : index
    %c0_15 = arith.constant 0 : index
    %28 = vector.load %arg4[%c0_13, %c0_14, %c0_15] : memref<2x4x256xf32, #tpu.memory_space<vmem>>, vector<2x4x256xf32>
    tpu.vector_store %arg4[%c0_13, %c0_14, %c0_15], %27 {strides = array<i32>} : memref<2x4x256xf32, #tpu.memory_space<vmem>>, vector<2x4x256xf32>,
    return
  }
  func.func @transform_0(%arg0: i32) -> (i32, i32, i32) {
    %c0_i32 = arith.constant 0 : i32
    %c0_i32_0 = arith.constant 0 : i32
    %c0_i32_1 = arith.constant 0 : i32
    return %c0_i32, %arg0, %c0_i32_0 : i32, i32, i32
  }
  func.func @transform_1(%arg0: i32) -> (i32, i32, i32) {
    %c0_i32 = arith.constant 0 : i32
    %c0_i32_0 = arith.constant 0 : i32
    %c0_i32_1 = arith.constant 0 : i32
    return %c0_i32, %arg0, %c0_i32_0 : i32, i32, i32
  }
  func.func @transform_2(%arg0: i32) -> (i32, i32, i32) {
    %c0_i32 = arith.constant 0 : i32
    %c0_i32_0 = arith.constant 0 : i32
    %c0_i32_1 = arith.constant 0 : i32
    return %c0_i32, %arg0, %c0_i32_0 : i32, i32, i32
  }
  func.func @transform_3(%arg0: i32) -> (i32, i32, i32) {
    %c0_i32 = arith.constant 0 : i32
    %c0_i32_0 = arith.constant 0 : i32
    %c0_i32_1 = arith.constant 0 : i32
    return %c0_i32, %arg0, %c0_i32_0 : i32, i32, i32
  }
}

</mosaic_0001>

<llo_original>
// kernel: tpu_custom_call.1
$region0: #{tpu_custom_call.1}
  #allocation0 [shape = 'u32[]', space=smem, size = 0x4, offset = 0x4, fixed_abs, tag = 'smem constant byte address 0x4 - core index']
  #allocation1 [shape = 'u32[144,128]{1,0:T(1,128)}', space=vmem, size = 0x12000, scoped, tag = 'internal scratch']
  %s0 = inlined_call_operand.vmem [shape: f32[2,4,256], index: 0, kind: input, shape index: {}]
  %s1 = inlined_call_operand.vmem [shape: f32[2,4,1], index: 1, kind: input, shape index: {}]
  %s2 = inlined_call_operand.vmem [shape: f32[2,4,1], index: 2, kind: input, shape index: {}]
  %s3 = inlined_call_operand.hbm [shape: f32[2,4,256], index: 3, kind: output, shape index: {}]
  %s4 = sld [smem:[#allocation0]]
  $region22: #{tpu_custom_call.1} parent=0
    _
  %s6 = ssub.s32 1, %s4
  %s7 = scalar_select 0, %s6, %s4
  $region1: #{tpu_custom_call.1} parent=0
    #allocation2 [shape = 'u8[8192]{0}', space=vmem, size = 0x2000, scoped, tag = 'output window, operand 0, single buffered']
    #allocation3 [shape = 's32[1]{0}', space=sflag, size = 0x4, scoped, tag = 'scoped memory for tpu_custom_call.1']
    %8 = vsyncpa [#allocation3], 0
    // Predicated region
    $region2: #{tpu_custom_call.1} parent=1 // pred_check
      _
    $region3: #{tpu_custom_call.1} parent=1 // pred_check_branch
      %10 = sbr.rel (0) target = $region5
    $region4: #{tpu_custom_call.1} parent=1 // pred_region
      _
    $region5: #{tpu_custom_call.1} parent=1 // pred_fallthru
      _
    // Predicated region
    $region6: #{tpu_custom_call.1} parent=1 // pred_check
      _
    $region7: #{tpu_custom_call.1} parent=1 // pred_check_branch
      %12 = sbr.rel (0) target = $region9
    $region8: #{tpu_custom_call.1} parent=1 // pred_region
      _
    $region9: #{tpu_custom_call.1} parent=1 // pred_fallthru
      _
    // Predicated region
    $region10: #{tpu_custom_call.1} parent=1 // pred_check
      _
    $region11: #{tpu_custom_call.1} parent=1 // pred_check_branch
      %14 = sbr.rel (0) target = $region13
    $region12: #{tpu_custom_call.1} parent=1 // pred_region
      _
    $region13: #{tpu_custom_call.1} parent=1 // pred_fallthru
      _
    %v15 = vld [vmem:[%s0] sm:$0xff]
    %v16 = vld [vmem:[%s0 + $0x8] sm:$0xff]
    %v19 = vcombine.high %v15, %v15
    %v20 = vcombine.high %v16, %v16
    %vm23 = vcmask 1043456
    %v24 = vsel %vm23, %v15, 0.0
    %v25 = vsel %vm23, %v19, 0.0
    %v26 = vadd.f32 %v24, %v25
    %v27 = vsel %vm23, %v16, 0.0
    %v28 = vadd.f32 %v26, %v27
    %v29 = vsel %vm23, %v20, 0.0
    %v30 = vadd.f32 %v28, %v29
    %31 = vadd.xlane.f32.xlu0 %v30
    %v32 = vpop.xlane.xlu0 %31
    %v33 = vmul.f32 %v15, %v15
    %v34 = vmul.f32 %v16, %v16
    %v37 = vcombine.high %v33, %v33
    %v38 = vcombine.high %v34, %v34
    %v41 = vsel %vm23, %v33, 0.0
    %v42 = vsel %vm23, %v37, 0.0
    %v43 = vadd.f32 %v41, %v42
    %v44 = vsel %vm23, %v34, 0.0
    %v45 = vadd.f32 %v43, %v44
    %v46 = vsel %vm23, %v38, 0.0
    %v47 = vadd.f32 %v45, %v46
    %48 = vadd.xlane.f32.xlu0 %v47
    %v49 = vpop.xlane.xlu0 %48
    %v50 = vrcp.pop 512.0
    %v51 = vmul.f32 %v32, %v50
    %v52 = vmul.f32 %v49, %v50
    %v53 = vmul.f32 %v51, %v51
    %v54 = vsub.f32 %v52, %v53
    %v55 = vmax.f32 %v54, 0.0
    %v56 = vadd.f32 %v55, 1e-05
    %v57 = vrsqrt.pop %v56
    %v58 = vld [vmem:[%s1] sm:$0xf]
    %v59 = vld [vmem:[%s1 + $0x4] sm:$0xf]
    %v60 = vld [vmem:[%s2] sm:$0xf]
    %v61 = vld [vmem:[%s2 + $0x4] sm:$0xf]
    %v62 = vmul.f32 %v58, %v57
    %v63 = vmul.f32 %v59, %v57
    %v64 = vmul.f32 %v62, %v51
    %v65 = vmul.f32 %v63, %v51
    %v66 = vsub.f32 %v60, %v64
    %v67 = vsub.f32 %v61, %v65
    %69 = vset.pattern.permute.xlu0 0
    %70 = vperm.xlu0 %69, %v62
    %v71 = vpop.permute.xlu0 %70
    %74 = vset.pattern.permute.xlu0 0
    %75 = vperm.xlu0 %74, %v63
    %v76 = vpop.permute.xlu0 %75
    %v78 = vmul.f32 %v71, %v15
    %v79 = vmul.f32 %v71, %v19
    %v80 = vmul.f32 %v76, %v16
    %v81 = vmul.f32 %v76, %v20
    %83 = vset.pattern.permute.xlu0 0
    %84 = vperm.xlu0 %83, %v66
    %v85 = vpop.permute.xlu0 %84
    %88 = vset.pattern.permute.xlu0 0
    %89 = vperm.xlu0 %88, %v67
    %v90 = vpop.permute.xlu0 %89
    %v92 = vadd.f32 %v78, %v85
    %v93 = vadd.f32 %v79, %v85
    %v94 = vadd.f32 %v80, %v90
    %v95 = vadd.f32 %v81, %v90
    %v100 = vcombine.low %v92, %v93
    %v101 = vcombine.low %v94, %v95
    %104 = vst [vmem:[#allocation2] sm:$0xff] %v100
    %105 = vst [vmem:[#allocation2 + $0x8] sm:$0xff] %v101
    // Predicated region
    $region14: #{tpu_custom_call.1} parent=1 // pred_check
      _
    $region15: #{tpu_custom_call.1} parent=1 // pred_check_branch
      %107 = sbr.rel (0) target = $region17
    $region16: #{tpu_custom_call.1} parent=1 // pred_region
      %s109 = ssub.s32 256, 256
      %110 = vsyncadd [#allocation3], %s109
      %s111 = sshll.u32 [#allocation2], 4
      %s112 = int_to_ptr.vmem [resolvable:$true] %s111
      %117 = dma.vmem_to_hbm [thread:$0]  %s112, 256, %s3, [#allocation3], 128, 128, 8
    $region17: #{tpu_custom_call.1} parent=1 // pred_fallthru
      _
    // Predicated region
    $region18: #{tpu_custom_call.1} parent=1 // pred_check
      _
    $region19: #{tpu_custom_call.1} parent=1 // pred_check_branch
      %119 = sbr.rel (0) target = $region21
    $region20: #{tpu_custom_call.1} parent=1 // pred_region
      %120 = dma.done [#allocation3], 256
    $region21: #{tpu_custom_call.1} parent=1 // pred_fallthru
      _
    %121 = vsyncpa [#allocation3], 1

</llo_original>
